<compile_context>
chip_gen: v7x
topology: tpu7x:2x2x1
jax: 0.10.0
libtpu: 0.0.40
codegen_flags: <defaults>
</compile_context>

<pallas_src>
import functools
import math

import jax
import jax.numpy as jnp
from jax.experimental import pallas as pl
from jax.experimental.pallas import tpu as pltpu


def _neighborhood_kernel(x_ref, w_ref, b_ref, o_ref, feat_ref, *, n):
    """x_ref: (TB, n*n, C); w_ref: (5C, out) [normalization pre-folded];
    b_ref: (1, out); o_ref: (TB*n, out); feat_ref: VMEM scratch (TB, n, 5C)."""
    TB, _, C = x_ref.shape

    xf = x_ref[...]                                    # (TB, n*n, C)
    x4 = xf.reshape(TB, n, n, C)                       # layout-preserving (n % 8 == 0)

    # --- raw second-order contractions (normalization folded into w_ref) ----
    rowsum = jnp.sum(x4, axis=1)                       # (TB, n, C)  sum over pdim1
    colsum = jnp.sum(x4, axis=2)                       # (TB, n, C)  sum over pdim2
    # diagonal x[b, i, i, :] via strided load over the flattened n*n axis
    diag = x_ref[:, pl.ds(0, n, stride=n + 1), :]      # (TB, n, C)

    # --- raw zeroth-order contractions ---------------------------------------
    sum_all = jnp.sum(rowsum, axis=1, keepdims=True)   # (TB, 1, C) = sum_ij x
    trace = jnp.sum(diag, axis=1, keepdims=True)       # (TB, 1, C) = trace

    # --- assemble fused (TB*n, 5C) operand in VMEM scratch --------------------
    feat_ref[:, :, 0 * C:1 * C] = rowsum
    feat_ref[:, :, 1 * C:2 * C] = colsum
    feat_ref[:, :, 2 * C:3 * C] = diag
    feat_ref[:, :, 3 * C:4 * C] = jnp.broadcast_to(sum_all, (TB, n, C))
    feat_ref[:, :, 4 * C:5 * C] = jnp.broadcast_to(trace, (TB, n, C))

    feats = feat_ref[...].reshape(TB * n, 5 * C)

    # --- single fused matmul (fat_mix_1d + fat_mix_0d) + sigmoid --------------
    mixed = jnp.dot(feats, w_ref[...], preferred_element_type=jnp.float32)
    mixed = mixed + b_ref[...]
    o_ref[...] = jax.nn.sigmoid(mixed).astype(o_ref.dtype)


def _choose_batch_tile(B, n, C, target_bytes=2 << 20):
    """Pick how many batch elements to process per grid step."""
    per_batch = n * n * C * 4
    tb = max(1, min(B, target_bytes // max(per_batch, 1)))
    if B >= 2:
        tb = min(tb, (B + 1) // 2)   # keep >=2 grid steps (feeds both v7x TensorCores)
    while B % tb:                    # full blocks only
        tb -= 1
    return tb


def neighborhood_forward(x, w1d, b1d, w0d, b0d, *, batch_tile=None):
    """x: (B, n, n, C); w1d: (out, 3C); w0d: (out, 2C); b1d/b0d: (out,)."""
    B, n, n2, C = x.shape
    assert n == n2
    # TODO(synk): general n would need padding or an eye-mask diag fallback; the
    # layout-preserving in-kernel reshape assumes n is a multiple of 8.
    assert n % 8 == 0, "this kernel assumes n is a multiple of 8"
    out = w1d.shape[0]
    assert w1d.shape == (out, 3 * C) and w0d.shape == (out, 2 * C)

    # Pack the two Linear layers into one fused weight / bias and fold the
    # 'mean' normalization into the weight columns so the kernel works on raw
    # sums. Feature order: [rowsum | colsum | diag | sum_all | trace] with
    # scales [1/n, 1/n, 1, 1/n^2, 1/n].
    inv_n = 1.0 / n
    scales = jnp.concatenate([
        jnp.full((C,), inv_n, jnp.float32),            # rowsum
        jnp.full((C,), inv_n, jnp.float32),            # colsum
        jnp.ones((C,), jnp.float32),                   # diag (unnormalized)
        jnp.full((C,), inv_n * inv_n, jnp.float32),    # rowcolsum = sum/n^2
        jnp.full((C,), inv_n, jnp.float32),            # diag_sum = trace/sqrt(n^2)
    ])
    w_cat = jnp.concatenate([w1d, w0d], axis=1).astype(jnp.float32)       # (out, 5C)
    w_fused = (w_cat * scales[None, :]).T                                 # (5C, out)
    b_fused = (b1d + b0d).reshape(1, out).astype(jnp.float32)             # (1, out)

    x_flat = x.reshape(B, n * n, C)   # free, layout-preserving

    TB = batch_tile if batch_tile is not None else _choose_batch_tile(B, n, C)
    assert B % TB == 0

    out_flat = pl.pallas_call(
        functools.partial(_neighborhood_kernel, n=n),
        out_shape=jax.ShapeDtypeStruct((B * n, out), jnp.float32),
        grid_spec=pltpu.PrefetchScalarGridSpec(
            num_scalar_prefetch=0,
            grid=(B // TB,),
            in_specs=[
                pl.BlockSpec((TB, n * n, C), lambda g: (g, 0, 0)),
                pl.BlockSpec((5 * C, out), lambda g: (0, 0)),
                pl.BlockSpec((1, out), lambda g: (0, 0)),
            ],
            out_specs=pl.BlockSpec((TB * n, out), lambda g: (g, 0)),
            scratch_shapes=[pltpu.VMEM((TB, n, 5 * C), jnp.float32)],
        ),
        compiler_params=pltpu.CompilerParams(
            dimension_semantics=("parallel",)),
    )(x_flat, w_fused, b_fused)

    return out_flat.reshape(B, n, out)


def neighborhood_reference(x, w1d, b1d, w0d, b0d):
    """Pure-JAX reference mirroring the PyTorch forward (mask=None, x_node=None)."""
    B, n, _, C = x.shape
    rowsum = jnp.sum(x, axis=1) / n
    colsum = jnp.sum(x, axis=2) / n
    diag = jnp.einsum('biic->bic', x)
    rowcolsum = jnp.sum(x, axis=(1, 2)) / (n * n)
    diag_sum = jnp.sum(diag, axis=1) / math.sqrt(n * n)
    raw_1d = jnp.concatenate([rowsum, colsum, diag], axis=-1)      # (B, n, 3C)
    raw_0d = jnp.concatenate([rowcolsum, diag_sum], axis=-1)       # (B, 2C)
    mixed_1d = raw_1d @ w1d.T + b1d
    mixed_0d = raw_0d @ w0d.T + b0d
    return jax.nn.sigmoid(mixed_1d + mixed_0d[:, None, :])


if __name__ == "__main__":
    B, n, C_in, neighb_channels = 2, 16, 4, 8

    key = jax.random.PRNGKey(0)
    kx, kw1, kb1, kw0, kb0 = jax.random.split(key, 5)

    x = jax.random.normal(kx, (B, n, n, C_in), dtype=jnp.float32)

    # Deterministic init mimicking nn.Linear (uniform in +-1/sqrt(fan_in)).
    fan1 = 3 * C_in
    fan0 = 2 * C_in
    w1d = jax.random.uniform(kw1, (neighb_channels, fan1), jnp.float32,
                             -1.0 / math.sqrt(fan1), 1.0 / math.sqrt(fan1))
    b1d = jax.random.uniform(kb1, (neighb_channels,), jnp.float32,
                             -1.0 / math.sqrt(fan1), 1.0 / math.sqrt(fan1))
    w0d = jax.random.uniform(kw0, (neighb_channels, fan0), jnp.float32,
                             -1.0 / math.sqrt(fan0), 1.0 / math.sqrt(fan0))
    b0d = jax.random.uniform(kb0, (neighb_channels,), jnp.float32,
                             -1.0 / math.sqrt(fan0), 1.0 / math.sqrt(fan0))

    out = neighborhood_forward(x, w1d, b1d, w0d, b0d)
    out = jax.block_until_ready(out)

    ref = neighborhood_reference(x, w1d, b1d, w0d, b0d)
    assert out.shape == (B, n, neighb_channels)
    assert jnp.allclose(out, ref, atol=1e-5, rtol=1e-5), "mismatch vs reference"

    print("KERNEL_OK")
</pallas_src>

<mosaic_0001>
module attributes {stable_mosaic.version = 11 : i64} {
  func.func @_neighborhood_kernel(%arg0: i32, %arg1: memref<1x256x4xf32, #tpu.memory_space<vmem>>, %arg2: memref<20x8xf32, #tpu.memory_space<vmem>>, %arg3: memref<1x8xf32, #tpu.memory_space<vmem>>, %arg4: memref<16x8xf32, #tpu.memory_space<vmem>>, %arg5: memref<1x16x20xf32, #tpu.memory_space<vmem>>) attributes {dimension_semantics = [#tpu.dimension_semantics<parallel>], iteration_bounds = array<i64: 2>, scalar_prefetch = 0 : i64, scratch_operands = 1 : i64, tpu.core_type = #tpu.core_type<tc>, window_params = [{transform_indices = @transform_0, window_bounds = array<i64: 1, 256, 4>}, {pipeline_mode = #tpu.pipeline_mode<synchronous>, transform_indices = @transform_1, window_bounds = array<i64: 20, 8>}, {pipeline_mode = #tpu.pipeline_mode<synchronous>, transform_indices = @transform_2, window_bounds = array<i64: 1, 8>}, {transform_indices = @transform_3, window_bounds = array<i64: 16, 8>}]} {
    %c0 = arith.constant 0 : index
    %c0_0 = arith.constant 0 : index
    %c0_1 = arith.constant 0 : index
    %0 = vector.load %arg1[%c0, %c0_0, %c0_1] : memref<1x256x4xf32, #tpu.memory_space<vmem>>, vector<1x256x4xf32>
    %1 = vector.shape_cast %0 : vector<1x256x4xf32> to vector<1x16x16x4xf32>
    %cst = arith.constant dense<0.000000e+00> : vector<1x16x4xf32>
    %2 = vector.multi_reduction <add>, %1, %cst [1] : vector<1x16x16x4xf32> to vector<1x16x4xf32>
    %cst_2 = arith.constant dense<0.000000e+00> : vector<1x16x4xf32>
    %3 = vector.multi_reduction <add>, %1, %cst_2 [2] : vector<1x16x16x4xf32> to vector<1x16x4xf32>
    %c0_3 = arith.constant 0 : index
    %c0_4 = arith.constant 0 : index
    %c0_5 = arith.constant 0 : index
    %4 = tpu.strided_load %arg1[%c0_3, %c0_4, %c0_5] {strides = array<i32: 1, 17, 1>} : memref<1x256x4xf32, #tpu.memory_space<vmem>>, vector<1x16x4xf32>
    %cst_6 = arith.constant dense<0.000000e+00> : vector<1x4xf32>
    %5 = vector.multi_reduction <add>, %2, %cst_6 [1] : vector<1x16x4xf32> to vector<1x4xf32>
    %6 = vector.shape_cast %5 : vector<1x4xf32> to vector<1x1x4xf32>
    %cst_7 = arith.constant dense<0.000000e+00> : vector<1x4xf32>
    %7 = vector.multi_reduction <add>, %4, %cst_7 [1] : vector<1x16x4xf32> to vector<1x4xf32>
    %8 = vector.shape_cast %7 : vector<1x4xf32> to vector<1x1x4xf32>
    %c0_8 = arith.constant 0 : index
    %c0_9 = arith.constant 0 : index
    %c0_10 = arith.constant 0 : index
    %9 = vector.load %arg5[%c0_8, %c0_9, %c0_10] : memref<1x16x20xf32, #tpu.memory_space<vmem>>, vector<1x16x4xf32>
    tpu.vector_store %arg5[%c0_8, %c0_9, %c0_10], %2 {strides = array<i32>} : memref<1x16x20xf32, #tpu.memory_space<vmem>>, vector<1x16x4xf32>,
    %c0_11 = arith.constant 0 : index
    %c0_12 = arith.constant 0 : index
    %c4 = arith.constant 4 : index
    %10 = vector.load %arg5[%c0_11, %c0_12, %c4] : memref<1x16x20xf32, #tpu.memory_space<vmem>>, vector<1x16x4xf32>
    tpu.vector_store %arg5[%c0_11, %c0_12, %c4], %3 {strides = array<i32>} : memref<1x16x20xf32, #tpu.memory_space<vmem>>, vector<1x16x4xf32>,
    %c0_13 = arith.constant 0 : index
    %c0_14 = arith.constant 0 : index
    %c8 = arith.constant 8 : index
    %11 = vector.load %arg5[%c0_13, %c0_14, %c8] : memref<1x16x20xf32, #tpu.memory_space<vmem>>, vector<1x16x4xf32>
    tpu.vector_store %arg5[%c0_13, %c0_14, %c8], %4 {strides = array<i32>} : memref<1x16x20xf32, #tpu.memory_space<vmem>>, vector<1x16x4xf32>,
    %12 = vector.shape_cast %6 : vector<1x1x4xf32> to vector<1x1x4xf32>
    %13 = vector.broadcast %12 : vector<1x1x4xf32> to vector<1x16x4xf32>
    %c0_15 = arith.constant 0 : index
    %c0_16 = arith.constant 0 : index
    %c12 = arith.constant 12 : index
    %14 = vector.load %arg5[%c0_15, %c0_16, %c12] : memref<1x16x20xf32, #tpu.memory_space<vmem>>, vector<1x16x4xf32>
    tpu.vector_store %arg5[%c0_15, %c0_16, %c12], %13 {strides = array<i32>} : memref<1x16x20xf32, #tpu.memory_space<vmem>>, vector<1x16x4xf32>,
    %15 = vector.shape_cast %8 : vector<1x1x4xf32> to vector<1x1x4xf32>
    %16 = vector.broadcast %15 : vector<1x1x4xf32> to vector<1x16x4xf32>
    %c0_17 = arith.constant 0 : index
    %c0_18 = arith.constant 0 : index
    %c16 = arith.constant 16 : index
    %17 = vector.load %arg5[%c0_17, %c0_18, %c16] : memref<1x16x20xf32, #tpu.memory_space<vmem>>, vector<1x16x4xf32>
    tpu.vector_store %arg5[%c0_17, %c0_18, %c16], %16 {strides = array<i32>} : memref<1x16x20xf32, #tpu.memory_space<vmem>>, vector<1x16x4xf32>,
    %c0_19 = arith.constant 0 : index
    %c0_20 = arith.constant 0 : index
    %c0_21 = arith.constant 0 : index
    %18 = vector.load %arg5[%c0_19, %c0_20, %c0_21] : memref<1x16x20xf32, #tpu.memory_space<vmem>>, vector<1x16x20xf32>
    %19 = vector.shape_cast %18 : vector<1x16x20xf32> to vector<16x20xf32>
    %c0_22 = arith.constant 0 : index
    %c0_23 = arith.constant 0 : index
    %20 = vector.load %arg2[%c0_22, %c0_23] : memref<20x8xf32, #tpu.memory_space<vmem>>, vector<20x8xf32>
    %cst_24 = arith.constant dense<0.000000e+00> : vector<16x8xf32>
    %21 = tpu.matmul %19, %20, %cst_24 {dimension_numbers = #tpu.dot_dimension_numbers<[1], [0], [0], [1], [0, 0, 1, 1], [], []>} : vector<16x20xf32>, vector<20x8xf32>, vector<16x8xf32> -> vector<16x8xf32>
    %c0_25 = arith.constant 0 : index
    %c0_26 = arith.constant 0 : index
    %22 = vector.load %arg3[%c0_25, %c0_26] : memref<1x8xf32, #tpu.memory_space<vmem>>, vector<1x8xf32>
    %23 = vector.broadcast %22 : vector<1x8xf32> to vector<16x8xf32>
    %24 = arith.addf %21, %23 : vector<16x8xf32>
    %25 = arith.negf %24 : vector<16x8xf32>
    %26 = math.exp %25 : vector<16x8xf32>
    %cst_27 = arith.constant 1.000000e+00 : f32
    %27 = vector.broadcast %cst_27 : f32 to vector<16x8xf32>
    %28 = arith.addf %27, %26 : vector<16x8xf32>
    %29 = arith.divf %27, %28 : vector<16x8xf32>
    %c0_28 = arith.constant 0 : index
    %c0_29 = arith.constant 0 : index
    %30 = vector.load %arg4[%c0_28, %c0_29] : memref<16x8xf32, #tpu.memory_space<vmem>>, vector<16x8xf32>
    tpu.vector_store %arg4[%c0_28, %c0_29], %29 {strides = array<i32>} : memref<16x8xf32, #tpu.memory_space<vmem>>, vector<16x8xf32>,
    return
  }
  func.func @transform_0(%arg0: i32) -> (i32, i32, i32) {
    %c0_i32 = arith.constant 0 : i32
    %c0_i32_0 = arith.constant 0 : i32
    %c0_i32_1 = arith.constant 0 : i32
    return %arg0, %c0_i32, %c0_i32_0 : i32, i32, i32
  }
  func.func @transform_1(%arg0: i32) -> (i32, i32) {
    %c0_i32 = arith.constant 0 : i32
    %c0_i32_0 = arith.constant 0 : i32
    %c0_i32_1 = arith.constant 0 : i32
    return %c0_i32, %c0_i32_0 : i32, i32
  }
  func.func @transform_2(%arg0: i32) -> (i32, i32) {
    %c0_i32 = arith.constant 0 : i32
    %c0_i32_0 = arith.constant 0 : i32
    %c0_i32_1 = arith.constant 0 : i32
    return %c0_i32, %c0_i32_0 : i32, i32
  }
  func.func @transform_3(%arg0: i32) -> (i32, i32) {
    %c0_i32 = arith.constant 0 : i32
    %c0_i32_0 = arith.constant 0 : i32
    return %arg0, %c0_i32 : i32, i32
  }
}

</mosaic_0001>

<llo_original>
// kernel: tpu_custom_call.1
$region0: #{tpu_custom_call.1}
  #allocation0 [shape = 'u32[]', space=smem, size = 0x4, offset = 0x4, fixed_abs, tag = 'smem constant byte address 0x4 - core index']
  #allocation1 [shape = 'u32[144,128]{1,0:T(1,128)}', space=vmem, size = 0x12000, scoped, tag = 'internal scratch']
  #allocation2 [shape = 'f32[1,16,20]{2,1,0:T(8,128)}', space=vmem, size = 0x2000, scoped, tag = 'scratch operand']
  %s0 = inlined_call_operand.vmem [shape: f32[2,256,4], index: 0, kind: input, shape index: {}]
  %s1 = inlined_call_operand.vmem [shape: f32[20,8], index: 1, kind: input, shape index: {}]
  %s2 = inlined_call_operand.vmem [shape: f32[1,8], index: 2, kind: input, shape index: {}]
  %s3 = inlined_call_operand.vmem [shape: f32[32,8], index: 3, kind: output, shape index: {}]
  %s4 = sld [smem:[#allocation0]]
  $region45: #{tpu_custom_call.1} parent=0
    _
  %s6 = ssub.s32 1, %s4
  %s7 = scalar_select 0, %s6, %s4
  loop: start=0, step=1, limit=4
  $region2: #{tpu_custom_call.1} parent=0 // loop_pre_header
    _
  $region3: #{tpu_custom_call.1} parent=0 // loop_header
    %s9 = sphi 0, %s13
    %p10 = scmp.ge.s32.totalorder %s9, 4
    %s19 = sphi 0, %s21
    %s22 = sphi 0, %s19
    %s23 = sphi 0, %s22
    %s39 = sphi 0, %s23
    %s43 = sphi 0, %s43
    %s45 = sphi 0, %s43
    %s46 = sphi 0, %s45
    %s60 = sphi 0, %s46
    %s64 = sphi 0, %s64
    %s66 = sphi 0, %s64
    %s67 = sphi 0, %s66
    %s81 = sphi 0, %s67
    %s87 = sphi 0, %s89
    %s90 = sphi 0, %s87
    %s91 = sphi 0, %s90
    %s107 = sphi 0, %s91
  $region4: #{tpu_custom_call.1} parent=0 // loop_header_branch
    %12 = sbr.rel (%p10) target = $region8
  $region5: #{tpu_custom_call.1} parent=0 // loop_body
    %s14 = ssub.s32 %s9, 1
    %s15 = ssub.s32 %s9, 2
    %s16 = sadd.s32 %s9, 1
    %s17 = ssub.s32 %s9, %s16
    %p18 = scmp.eq.s32.totalorder %s17, 0
    %s20 = sadd.s32 %s19, 1
    %s21 = scalar_select %p18, %s19, %s20
    %p24 = pneg %p18
    %p25 = scmp.eq.s32.totalorder %s9, 1
    %p26 = por %p24, %p25
    %p27 = scmp.ne.s32.totalorder %s19, %s22
    %p28 = scmp.eq.s32.totalorder %s9, 0
    %p29 = por %p27, %p28
    %p30 = scmp.ne.s32.totalorder %s19, %s22
    %p31 = scmp.eq.s32.totalorder %s14, 1
    %p32 = por %p30, %p31
    %p33 = scmp.ne.s32.totalorder %s22, %s23
    %p34 = scmp.eq.s32.totalorder %s14, 0
    %p35 = por %p33, %p34
    %p36 = scmp.ne.s32.totalorder %s22, %s23
    %p37 = scmp.eq.s32.totalorder %s15, 1
    %p38 = por %p36, %p37
    %p40 = scmp.ne.s32.totalorder %s23, %s39
    %p41 = scmp.eq.s32.totalorder %s15, 0
    %p42 = por %p40, %p41
    %s44 = sadd.s32 %s43, 1
    %p47 = scmp.eq.s32.totalorder %s9, 1
    %p48 = scmp.ne.s32.totalorder %s43, %s45
    %p49 = scmp.eq.s32.totalorder %s9, 0
    %p50 = por %p48, %p49
    %p51 = scmp.ne.s32.totalorder %s43, %s45
    %p52 = scmp.eq.s32.totalorder %s14, 1
    %p53 = por %p51, %p52
    %p54 = scmp.ne.s32.totalorder %s45, %s46
    %p55 = scmp.eq.s32.totalorder %s14, 0
    %p56 = por %p54, %p55
    %p57 = scmp.ne.s32.totalorder %s45, %s46
    %p58 = scmp.eq.s32.totalorder %s15, 1
    %p59 = por %p57, %p58
    %p61 = scmp.ne.s32.totalorder %s46, %s60
    %p62 = scmp.eq.s32.totalorder %s15, 0
    %p63 = por %p61, %p62
    %s65 = sadd.s32 %s64, 1
    %p68 = scmp.eq.s32.totalorder %s9, 1
    %p69 = scmp.ne.s32.totalorder %s64, %s66
    %p70 = scmp.eq.s32.totalorder %s9, 0
    %p71 = por %p69, %p70
    %p72 = scmp.ne.s32.totalorder %s64, %s66
    %p73 = scmp.eq.s32.totalorder %s14, 1
    %p74 = por %p72, %p73
    %p75 = scmp.ne.s32.totalorder %s66, %s67
    %p76 = scmp.eq.s32.totalorder %s14, 0
    %p77 = por %p75, %p76
    %p78 = scmp.ne.s32.totalorder %s66, %s67
    %p79 = scmp.eq.s32.totalorder %s15, 1
    %p80 = por %p78, %p79
    %p82 = scmp.ne.s32.totalorder %s67, %s81
    %p83 = scmp.eq.s32.totalorder %s15, 0
    %p84 = por %p82, %p83
    %s85 = ssub.s32 %s9, %s16
    %p86 = scmp.eq.s32.totalorder %s85, 0
    %s88 = sadd.s32 %s87, 1
    %s89 = scalar_select %p86, %s87, %s88
    %p92 = pneg %p86
    %p93 = scmp.eq.s32.totalorder %s9, 1
    %p94 = por %p92, %p93
    %p95 = scmp.ne.s32.totalorder %s87, %s90
    %p96 = scmp.eq.s32.totalorder %s9, 0
    %p97 = por %p95, %p96
    %p98 = scmp.ne.s32.totalorder %s87, %s90
    %p99 = scmp.eq.s32.totalorder %s14, 1
    %p100 = por %p98, %p99
    %p101 = scmp.ne.s32.totalorder %s90, %s91
    %p102 = scmp.eq.s32.totalorder %s14, 0
    %p103 = por %p101, %p102
    %p104 = scmp.ne.s32.totalorder %s90, %s91
    %p105 = scmp.eq.s32.totalorder %s15, 1
    %p106 = por %p104, %p105
    %p108 = scmp.ne.s32.totalorder %s91, %s107
    %p109 = scmp.eq.s32.totalorder %s15, 0
    %p110 = por %p108, %p109
    %p111 = scmp.le.s32.totalorder 1, %s9
    %p112 = scmp.lt.s32.totalorder %s9, 3
    %p113 = pnand %p111, %p112
    %p114 = pneg %p113
    // Predicated region
    $region9: #{tpu_custom_call.1} parent=5 // pred_check
      _
    $region10: #{tpu_custom_call.1} parent=5 // pred_check_branch
      %116 = sbr.rel (%p113) target = $region12
    $region11: #{tpu_custom_call.1} parent=5 // pred_region
      %s117 = ssub.s32 %s9, 1
      // Predicated region
      $region13: #{tpu_custom_call.1} parent=11 // pred_check
        %p118 = pneg %p56
      $region14: #{tpu_custom_call.1} parent=11 // pred_check_branch
        %120 = sbr.rel (%p118) target = $region16
      $region15: #{tpu_custom_call.1} parent=11 // pred_region
        _
      $region16: #{tpu_custom_call.1} parent=11 // pred_fallthru
        _
      // Predicated region
      $region17: #{tpu_custom_call.1} parent=11 // pred_check
        %p121 = pneg %p77
      $region18: #{tpu_custom_call.1} parent=11 // pred_check_branch
        %123 = sbr.rel (%p121) target = $region20
      $region19: #{tpu_custom_call.1} parent=11 // pred_region
        _
      $region20: #{tpu_custom_call.1} parent=11 // pred_fallthru
        _
    $region12: #{tpu_custom_call.1} parent=5 // pred_fallthru
      _
    %p124 = scmp.lt.s32.totalorder %s9, 2
    // Predicated region
    $region21: #{tpu_custom_call.1} parent=5 // pred_check
      %p125 = pneg %p124
    $region22: #{tpu_custom_call.1} parent=5 // pred_check_branch
      %127 = sbr.rel (%p125) target = $region24
    $region23: #{tpu_custom_call.1} parent=5 // pred_region
      // Predicated region
      $region25: #{tpu_custom_call.1} parent=23 // pred_check
        %p128 = pneg %p29
      $region26: #{tpu_custom_call.1} parent=23 // pred_check_branch
        %130 = sbr.rel (%p128) target = $region28
      $region27: #{tpu_custom_call.1} parent=23 // pred_region
        %p131 = scmp.lt.s32.totalorder %s9, 1
        %s132 = scalar_select %p131, %s9, 1
        %s133 = smul.addr %s132, 32
        %s134 = smul.addr %s133, 8
        %s135 = scalar_lea.vmem %s0, %s134
      $region28: #{tpu_custom_call.1} parent=23 // pred_fallthru
        _
    $region24: #{tpu_custom_call.1} parent=5 // pred_fallthru
      _
    %p136 = scmp.le.s32.totalorder 1, %s9
    %p137 = scmp.lt.s32.totalorder %s9, 3
    %p138 = pnand %p136, %p137
    %p139 = pneg %p138
    // Predicated region
    $region29: #{tpu_custom_call.1} parent=5 // pred_check
      _
    $region30: #{tpu_custom_call.1} parent=5 // pred_check_branch
      %141 = sbr.rel (%p138) target = $region32
    $region31: #{tpu_custom_call.1} parent=5 // pred_region
      %s142 = ssub.s32 %s9, 1
      %p143 = scmp.lt.s32.totalorder %s14, 1
      %s144 = scalar_select %p143, %s14, 1
      %s145 = smul.addr %s144, 32
      %s146 = smul.addr %s145, 8
      %s147 = scalar_lea.vmem %s0, %s146
      %p148 = pneg %p35
      %p149 = pneg %p32
      %p150 = pneg %p56
      %p151 = pneg %p53
      %p152 = pneg %p77
      %p153 = pneg %p74
      %p154 = pneg %p103
      %p155 = pneg %p100
      %s156 = smul.u32 2, %s14
      %p157 = scmp.lt.s32.totalorder %s156, 3
      %s158 = scalar_select %p157, %s156, 3
      %s159 = smul.addr %s158, 8
      %s160 = scalar_lea.vmem %s3, %s159
      %p161 = scmp.lt.s32.totalorder %s14, 1
      %s162 = scalar_select %p161, %s14, 1
      %s163 = smul.addr %s162, 32
      %s164 = smul.addr %s163, 8
      %s165 = scalar_lea.vmem %s0, %s164
      %s166 = smul.u32 2, %s14
      %p167 = scmp.lt.s32.totalorder %s166, 3
      %s168 = scalar_select %p167, %s166, 3
      %s169 = smul.addr %s168, 8
      %s170 = scalar_lea.vmem %s3, %s169
      %s171 = smul.u32 2, %s14
      %v172 = vld [vmem:[%s165] sm:$0xff]
      %v173 = vld [vmem:[%s165 + $0x8] sm:$0xff]
      %v174 = vld [vmem:[%s165 + $0x10] sm:$0xff]
      %v175 = vld [vmem:[%s165 + $0x18] sm:$0xff]
      %v176 = vld [vmem:[%s165 + $0x20] sm:$0xff]
      %v177 = vld [vmem:[%s165 + $0x28] sm:$0xff]
      %v178 = vld [vmem:[%s165 + $0x30] sm:$0xff]
      %v179 = vld [vmem:[%s165 + $0x38] sm:$0xff]
      %v180 = vld [vmem:[%s165 + $0x40] sm:$0xff]
      %v181 = vld [vmem:[%s165 + $0x48] sm:$0xff]
      %v182 = vld [vmem:[%s165 + $0x50] sm:$0xff]
      %v183 = vld [vmem:[%s165 + $0x58] sm:$0xff]
      %v184 = vld [vmem:[%s165 + $0x60] sm:$0xff]
      %v185 = vld [vmem:[%s165 + $0x68] sm:$0xff]
      %v186 = vld [vmem:[%s165 + $0x70] sm:$0xff]
      %v187 = vld [vmem:[%s165 + $0x78] sm:$0xff]
      %v188 = vld [vmem:[%s165 + $0x80] sm:$0xff]
      %v189 = vld [vmem:[%s165 + $0x88] sm:$0xff]
      %v190 = vld [vmem:[%s165 + $0x90] sm:$0xff]
      %v191 = vld [vmem:[%s165 + $0x98] sm:$0xff]
      %v192 = vld [vmem:[%s165 + $0xa0] sm:$0xff]
      %v193 = vld [vmem:[%s165 + $0xa8] sm:$0xff]
      %v194 = vld [vmem:[%s165 + $0xb0] sm:$0xff]
      %v195 = vld [vmem:[%s165 + $0xb8] sm:$0xff]
      %v196 = vld [vmem:[%s165 + $0xc0] sm:$0xff]
      %v197 = vld [vmem:[%s165 + $0xc8] sm:$0xff]
      %v198 = vld [vmem:[%s165 + $0xd0] sm:$0xff]
      %v199 = vld [vmem:[%s165 + $0xd8] sm:$0xff]
      %v200 = vld [vmem:[%s165 + $0xe0] sm:$0xff]
      %v201 = vld [vmem:[%s165 + $0xe8] sm:$0xff]
      %v202 = vld [vmem:[%s165 + $0xf0] sm:$0xff]
      %v203 = vld [vmem:[%s165 + $0xf8] sm:$0xff]
      %vm204 = vcmask 31744
      %v205 = vsel %vm204, %v172, 0.0
      %v206 = vsel %vm204, %v174, 0.0
      %v207 = vadd.f32 %v205, %v206
      %v208 = vsel %vm204, %v176, 0.0
      %v209 = vadd.f32 %v207, %v208
      %v210 = vsel %vm204, %v178, 0.0
      %v211 = vadd.f32 %v209, %v210
      %v212 = vsel %vm204, %v180, 0.0
      %v213 = vadd.f32 %v211, %v212
      %v214 = vsel %vm204, %v182, 0.0
      %v215 = vadd.f32 %v213, %v214
      %v216 = vsel %vm204, %v184, 0.0
      %v217 = vadd.f32 %v215, %v216
      %v218 = vsel %vm204, %v186, 0.0
      %v219 = vadd.f32 %v217, %v218
      %v220 = vsel %vm204, %v188, 0.0
      %v221 = vadd.f32 %v219, %v220
      %v222 = vsel %vm204, %v190, 0.0
      %v223 = vadd.f32 %v221, %v222
      %v224 = vsel %vm204, %v192, 0.0
      %v225 = vadd.f32 %v223, %v224
      %v226 = vsel %vm204, %v194, 0.0
      %v227 = vadd.f32 %v225, %v226
      %v228 = vsel %vm204, %v196, 0.0
      %v229 = vadd.f32 %v227, %v228
      %v230 = vsel %vm204, %v198, 0.0
      %v231 = vadd.f32 %v229, %v230
      %v232 = vsel %vm204, %v200, 0.0
      %v233 = vadd.f32 %v231, %v232
      %v234 = vsel %vm204, %v202, 0.0
      %v235 = vadd.f32 %v233, %v234
      %v236 = vsel %vm204, %v173, 0.0
      %v237 = vsel %vm204, %v175, 0.0
      %v238 = vadd.f32 %v236, %v237
      %v239 = vsel %vm204, %v177, 0.0
      %v240 = vadd.f32 %v238, %v239
      %v241 = vsel %vm204, %v179, 0.0
      %v242 = vadd.f32 %v240, %v241
      %v243 = vsel %vm204, %v181, 0.0
      %v244 = vadd.f32 %v242, %v243
      %v245 = vsel %vm204, %v183, 0.0
      %v246 = vadd.f32 %v244, %v245
      %v247 = vsel %vm204, %v185, 0.0
      %v248 = vadd.f32 %v246, %v247
      %v249 = vsel %vm204, %v187, 0.0
      %v250 = vadd.f32 %v248, %v249
      %v251 = vsel %vm204, %v189, 0.0
      %v252 = vadd.f32 %v250, %v251
      %v253 = vsel %vm204, %v191, 0.0
      %v254 = vadd.f32 %v252, %v253
      %v255 = vsel %vm204, %v193, 0.0
      %v256 = vadd.f32 %v254, %v255
      %v257 = vsel %vm204, %v195, 0.0
      %v258 = vadd.f32 %v256, %v257
      %v259 = vsel %vm204, %v197, 0.0
      %v260 = vadd.f32 %v258, %v259
      %v261 = vsel %vm204, %v199, 0.0
      %v262 = vadd.f32 %v260, %v261
      %v263 = vsel %vm204, %v201, 0.0
      %v264 = vadd.f32 %v262, %v263
      %v265 = vsel %vm204, %v203, 0.0
      %v266 = vadd.f32 %v264, %v265
      %v267 = vadd.f32 %v205, %v236
      %v268 = vrot.slane %v267, 4
      %v269 = vadd.f32 %v267, %v268
      %v270 = vrot.slane %v269, 2
      %v271 = vadd.f32 %v269, %v270
      %v272 = vrot.slane %v271, 1
      %v273 = vadd.f32 %v271, %v272
      %v274 = vadd.f32 %v206, %v237
      %v275 = vrot.slane %v274, 4
      %v276 = vadd.f32 %v274, %v275
      %v277 = vrot.slane %v276, 2
      %v278 = vadd.f32 %v276, %v277
      %v279 = vrot.slane %v278, 1
      %v280 = vadd.f32 %v278, %v279
      %v281 = vadd.f32 %v208, %v239
      %v282 = vrot.slane %v281, 4
      %v283 = vadd.f32 %v281, %v282
      %v284 = vrot.slane %v283, 2
      %v285 = vadd.f32 %v283, %v284
      %v286 = vrot.slane %v285, 1
      %v287 = vadd.f32 %v285, %v286
      %v288 = vadd.f32 %v210, %v241
      %v289 = vrot.slane %v288, 4
      %v290 = vadd.f32 %v288, %v289
      %v291 = vrot.slane %v290, 2
      %v292 = vadd.f32 %v290, %v291
      %v293 = vrot.slane %v292, 1
      %v294 = vadd.f32 %v292, %v293
      %v295 = vadd.f32 %v212, %v243
      %v296 = vrot.slane %v295, 4
      %v297 = vadd.f32 %v295, %v296
      %v298 = vrot.slane %v297, 2
      %v299 = vadd.f32 %v297, %v298
      %v300 = vrot.slane %v299, 1
      %v301 = vadd.f32 %v299, %v300
      %v302 = vadd.f32 %v214, %v245
      %v303 = vrot.slane %v302, 4
      %v304 = vadd.f32 %v302, %v303
      %v305 = vrot.slane %v304, 2
      %v306 = vadd.f32 %v304, %v305
      %v307 = vrot.slane %v306, 1
      %v308 = vadd.f32 %v306, %v307
      %v309 = vadd.f32 %v216, %v247
      %v310 = vrot.slane %v309, 4
      %v311 = vadd.f32 %v309, %v310
      %v312 = vrot.slane %v311, 2
      %v313 = vadd.f32 %v311, %v312
      %v314 = vrot.slane %v313, 1
      %v315 = vadd.f32 %v313, %v314
      %v316 = vadd.f32 %v218, %v249
      %v317 = vrot.slane %v316, 4
      %v318 = vadd.f32 %v316, %v317
      %v319 = vrot.slane %v318, 2
      %v320 = vadd.f32 %v318, %v319
      %v321 = vrot.slane %v320, 1
      %v322 = vadd.f32 %v320, %v321
      %v323 = vadd.f32 %v220, %v251
      %v324 = vrot.slane %v323, 4
      %v325 = vadd.f32 %v323, %v324
      %v326 = vrot.slane %v325, 2
      %v327 = vadd.f32 %v325, %v326
      %v328 = vrot.slane %v327, 1
      %v329 = vadd.f32 %v327, %v328
      %v330 = vadd.f32 %v222, %v253
      %v331 = vrot.slane %v330, 4
      %v332 = vadd.f32 %v330, %v331
      %v333 = vrot.slane %v332, 2
      %v334 = vadd.f32 %v332, %v333
      %v335 = vrot.slane %v334, 1
      %v336 = vadd.f32 %v334, %v335
      %v337 = vadd.f32 %v224, %v255
      %v338 = vrot.slane %v337, 4
      %v339 = vadd.f32 %v337, %v338
      %v340 = vrot.slane %v339, 2
      %v341 = vadd.f32 %v339, %v340
      %v342 = vrot.slane %v341, 1
      %v343 = vadd.f32 %v341, %v342
      %v344 = vadd.f32 %v226, %v257
      %v345 = vrot.slane %v344, 4
      %v346 = vadd.f32 %v344, %v345
      %v347 = vrot.slane %v346, 2
      %v348 = vadd.f32 %v346, %v347
      %v349 = vrot.slane %v348, 1
      %v350 = vadd.f32 %v348, %v349
      %v351 = vadd.f32 %v228, %v259
      %v352 = vrot.slane %v351, 4
      %v353 = vadd.f32 %v351, %v352
      %v354 = vrot.slane %v353, 2
      %v355 = vadd.f32 %v353, %v354
      %v356 = vrot.slane %v355, 1
      %v357 = vadd.f32 %v355, %v356
      %v358 = vadd.f32 %v230, %v261
      %v359 = vrot.slane %v358, 4
      %v360 = vadd.f32 %v358, %v359
      %v361 = vrot.slane %v360, 2
      %v362 = vadd.f32 %v360, %v361
      %v363 = vrot.slane %v362, 1
      %v364 = vadd.f32 %v362, %v363
      %v365 = vadd.f32 %v232, %v263
      %v366 = vrot.slane %v365, 4
      %v367 = vadd.f32 %v365, %v366
      %v368 = vrot.slane %v367, 2
      %v369 = vadd.f32 %v367, %v368
      %v370 = vrot.slane %v369, 1
      %v371 = vadd.f32 %v369, %v370
      %v372 = vadd.f32 %v234, %v265
      %v373 = vrot.slane %v372, 4
      %v374 = vadd.f32 %v372, %v373
      %v375 = vrot.slane %v374, 2
      %v376 = vadd.f32 %v374, %v375
      %v377 = vrot.slane %v376, 1
      %v378 = vadd.f32 %v376, %v377
      %v379 = vld [vmem:[%s165] ss:$17 sm:$0xff]
      %s380 = scalar_lea.vmem %s165, 136
      %v381 = vld [vmem:[%s380] ss:$17 sm:$0xff]
      %v382 = vsel %vm204, %v235, 0.0
      %v383 = vsel %vm204, %v266, 0.0
      %v384 = vadd.f32 %v382, %v383
      %v385 = vrot.slane %v384, 4
      %v386 = vadd.f32 %v384, %v385
      %v387 = vrot.slane %v386, 2
      %v388 = vadd.f32 %v386, %v387
      %v389 = vrot.slane %v388, 1
      %v390 = vadd.f32 %v388, %v389
      %v391 = vsel %vm204, %v379, 0.0
      %v392 = vsel %vm204, %v381, 0.0
      %v393 = vadd.f32 %v391, %v392
      %v394 = vrot.slane %v393, 4
      %v395 = vadd.f32 %v393, %v394
      %v396 = vrot.slane %v395, 2
      %v397 = vadd.f32 %v395, %v396
      %v398 = vrot.slane %v397, 1
      %v399 = vadd.f32 %v397, %v398
      %400 = vst.msk [vmem:[#allocation2] sm:$0xff] %vm204, %v235
      %401 = vst.msk [vmem:[#allocation2 + $0x8] sm:$0xff] %vm204, %v266
      %vm418 = vcmask 1041409
      %v419 = vsel %vm418, %v280, %v273
      %vm420 = vcmask 1042434
      %v421 = vsel %vm420, %v287, %v419
      %vm422 = vcmask 1043459
      %v423 = vsel %vm422, %v294, %v421
      %vm424 = vcmask 1044484
      %v425 = vsel %vm424, %v301, %v423
      %vm426 = vcmask 1045509
      %v427 = vsel %vm426, %v308, %v425
      %vm428 = vcmask 1046534
      %v429 = vsel %vm428, %v315, %v427
      %vm430 = vcmask 1047559
      %v431 = vsel %vm430, %v322, %v429
      %v432 = vsel %vm418, %v336, %v329
      %v433 = vsel %vm420, %v343, %v432
      %v434 = vsel %vm422, %v350, %v433
      %v435 = vsel %vm424, %v357, %v434
      %v436 = vsel %vm426, %v364, %v435
      %v437 = vsel %vm428, %v371, %v436
      %v438 = vsel %vm430, %v378, %v437
      %439 = vrot.lane.b32.xlu0 %v431, 4
      %v440 = vpop.permute.xlu0 %439
      %441 = vrot.lane.b32.xlu0 %v438, 4
      %v442 = vpop.permute.xlu0 %441
      %vm445 = vcmask 64544
      %446 = vst.msk [vmem:[#allocation2] sm:$0xff] %vm445, %v440
      %447 = vst.msk [vmem:[#allocation2 + $0x8] sm:$0xff] %vm445, %v442
      %450 = vrot.lane.b32.xlu0 %v379, 8
      %v451 = vpop.permute.xlu0 %450
      %452 = vrot.lane.b32.xlu0 %v381, 8
      %v453 = vpop.permute.xlu0 %452
      %vm456 = vcmask 97344
      %457 = vst.msk [vmem:[#allocation2] sm:$0xff] %vm456, %v451
      %458 = vst.msk [vmem:[#allocation2 + $0x8] sm:$0xff] %vm456, %v453
      %460 = vrot.lane.b32.xlu0 %v390, 12
      %v461 = vpop.permute.xlu0 %460
      %vm463 = vcmask 130144
      %464 = vst.msk [vmem:[#allocation2] sm:$0xff] %vm463, %v461
      %465 = vst.msk [vmem:[#allocation2 + $0x8] sm:$0xff] %vm463, %v461
      %467 = vrot.lane.b32.xlu0 %v399, 16
      %v468 = vpop.permute.xlu0 %467
      %vm470 = vcmask 162944
      %471 = vst.msk [vmem:[#allocation2] sm:$0xff] %vm470, %v468
      %472 = vst.msk [vmem:[#allocation2 + $0x8] sm:$0xff] %vm470, %v468
      %v473 = vld [vmem:[#allocation2] sm:$0xff]
      %v474 = vld [vmem:[#allocation2 + $0x8] sm:$0xff]
      %v475 = vld [vmem:[%s1] sm:$0xff]
      %v476 = vld [vmem:[%s1 + $0x8] sm:$0xff]
      %v477 = vld [vmem:[%s1 + $0x10] sm:$0xf]
      %v478 = vld [vmem:[%s2] sm:$0x1]
      %v480 = vlaneseq
      %v481 = vshrl.u32 %v480, 7
      %v482 = vsub.s32 0, %v481
      %v483 = vrot.slane %v478, %v482
      %vm485 = vcmask 162816
      %v487 = vsel %vm485, %v473, 0
      %v490 = vsel %vm485, %v474, 0
      %vm492 = vcmask 1043456
      %v494 = vsel %vm492, %v477, 0
      %496 = vmatprep.subr.mxu0 0.0
      %497 = vmatpush1.msra.mxu0 %v475
      %498 = vmatprep.subr.mxu0 0.0
      %499 = vmatpush1.msra.mxu0 %v476
      %500 = vmatprep.subr.mxu0 0.0
      %501 = vmatpush1.msra.mxu0 %v494
      %502 = vmatprep.subr.mxu0 0.0
      %503 = vmatpush1.msra.mxu0 0.0
      %504 = vmatprep.subr.mxu0 0.0
      %505 = vmatpush1.msra.mxu0 0.0
      %506 = vmatprep.subr.mxu0 0.0
      %507 = vmatpush1.msra.mxu0 0.0
      %508 = vmatprep.subr.mxu0 0.0
      %509 = vmatpush1.msra.mxu0 0.0
      %510 = vmatprep.subr.mxu0 0.0
      %511 = vmatpush1.msra.mxu0 0.0
      %512 = vmatprep.subr.mxu0 0.0
      %513 = vmatpush1.msra.mxu0 0.0
      %514 = vmatprep.subr.mxu0 0.0
      %515 = vmatpush1.msra.mxu0 0.0
      %516 = vmatprep.subr.mxu0 0.0
      %517 = vmatpush1.msra.mxu0 0.0
      %518 = vmatprep.subr.mxu0 0.0
      %519 = vmatpush1.msra.mxu0 0.0
      %520 = vmatprep.subr.mxu0 0.0
      %521 = vmatpush1.msra.mxu0 0.0
      %522 = vmatprep.subr.mxu0 0.0
      %523 = vmatpush1.msra.mxu0 0.0
      %524 = vmatprep.subr.mxu0 0.0
      %525 = vmatpush1.msra.mxu0 0.0
      %526 = vmatprep.subr.mxu0 0.0
      %527 = vmatpush1.msra.mxu0 0.0
      %528 = vmatprep.subr.mxu0 0.0
      %529 = vmatpush1.msra.mxu0 0.0
      %530 = vmatprep.subr.mxu0 0.0
      %531 = vmatpush1.msra.mxu0 0.0
      %532 = vmatprep.subr.mxu0 0.0
      %533 = vmatpush1.msra.mxu0 0.0
      %534 = vmatprep.subr.mxu0 0.0
      %535 = vmatpush1.msra.mxu0 0.0
      %536 = vmatprep.subr.mxu0 0.0
      %537 = vmatpush1.msra.mxu0 0.0
      %538 = vmatprep.subr.mxu0 0.0
      %539 = vmatpush1.msra.mxu0 0.0
      %540 = vmatprep.subr.mxu0 0.0
      %541 = vmatpush1.msra.mxu0 0.0
      %542 = vmatprep.subr.mxu0 0.0
      %543 = vmatpush1.msra.mxu0 0.0
      %544 = vmatprep.subr.mxu0 0.0
      %545 = vmatpush1.msra.mxu0 0.0
      %546 = vmatprep.subr.mxu0 0.0
      %547 = vmatpush1.msra.mxu0 0.0
      %548 = vmatprep.subr.mxu0 0.0
      %549 = vmatpush1.msra.mxu0 0.0
      %550 = vmatprep.subr.mxu0 0.0
      %551 = vmatpush1.msra.mxu0 0.0
      %552 = vmatprep.subr.mxu0 0.0
      %553 = vmatpush1.msra.mxu0 0.0
      %554 = vmatprep.subr.mxu0 0.0
      %555 = vmatpush1.msra.mxu0 0.0
      %556 = vmatprep.subr.mxu0 0.0
      %557 = vmatpush1.msra.mxu0 0.0
      %558 = vmatprep.subr.mxu0 0.0
      %559 = vmatpush1.msra.mxu0 0.0
      %560 = vmatprep.mubr.f32.mxu0 0.0
      %561 = vmatmul.mubr.f32.gmra.mrb[0].mxu0 %v487
      %v562 = vpop.f32.mrb[0].mxu0
      %v563 = vadd.f32 %v483, %v562
      %v564 = vpop.f32.mrb[0].mxu0
      %565 = vmatprep.mubr.f32.mxu0 0.0
      %566 = vmatmul.mubr.f32.gmra.mrb[0].mxu0 %v490
      %v567 = vpop.f32.mrb[0].mxu0
      %v568 = vadd.f32 %v483, %v567
      %v569 = vpop.f32.mrb[0].mxu0
      %570 = vdwg.mxu0
      %v571 = vxor.u32 %v563, 2147483648
      %v572 = vxor.u32 %v568, 2147483648
      %v573 = vmul.f32 %v571, 1.442695
      %v574 = vpow.pop %v573
      %v575 = vmul.f32 %v572, 1.442695
      %v576 = vpow.pop %v575
      %v577 = vadd.f32 %v574, 1.0
      %v578 = vadd.f32 %v576, 1.0
      %v579 = vrcp.pop %v577
      %v580 = vmul.f32 1.0, %v579
      %v581 = vrcp.pop %v578
      %v582 = vmul.f32 1.0, %v581
      %vm583 = vcmask 64512
      %584 = vst.msk [vmem:[%s170] sm:$0xff] %vm583, %v580
      %585 = vst.msk [vmem:[%s170 + $0x8] sm:$0xff] %vm583, %v582
      %s586 = smul.u32 2, %s14
      %p587 = scmp.lt.s32.totalorder %s586, 3
      %s588 = scalar_select %p587, %s586, 3
      %s589 = smul.addr %s588, 8
      %s590 = scalar_lea.vmem %s3, %s589
      // Predicated region
      $region33: #{tpu_custom_call.1} parent=31 // pred_check
        %p591 = pneg %p100
      $region34: #{tpu_custom_call.1} parent=31 // pred_check_branch
        %593 = sbr.rel (%p591) target = $region36
      $region35: #{tpu_custom_call.1} parent=31 // pred_region
        %s594 = smul.u32 2, %s14
      $region36: #{tpu_custom_call.1} parent=31 // pred_fallthru
        _
    $region32: #{tpu_custom_call.1} parent=5 // pred_fallthru
      _
    %p595 = scmp.le.s32.totalorder 2, %s9
    // Predicated region
    $region37: #{tpu_custom_call.1} parent=5 // pred_check
      %p596 = pneg %p595
    $region38: #{tpu_custom_call.1} parent=5 // pred_check_branch
      %598 = sbr.rel (%p596) target = $region40
    $region39: #{tpu_custom_call.1} parent=5 // pred_region
      %s599 = ssub.s32 %s9, 2
      // Predicated region
      $region41: #{tpu_custom_call.1} parent=39 // pred_check
        %p600 = pneg %p106
      $region42: #{tpu_custom_call.1} parent=39 // pred_check_branch
        %602 = sbr.rel (%p600) target = $region44
      $region43: #{tpu_custom_call.1} parent=39 // pred_region
        %s603 = smul.u32 2, %s15
        %p604 = scmp.lt.s32.totalorder %s603, 3
        %s605 = scalar_select %p604, %s603, 3
        %s606 = smul.addr %s605, 8
        %s607 = scalar_lea.vmem %s3, %s606
      $region44: #{tpu_custom_call.1} parent=39 // pred_fallthru
        _
    $region40: #{tpu_custom_call.1} parent=5 // pred_fallthru
      _
  $region6: #{tpu_custom_call.1} parent=0 // loop_footer
    %s13 = sadd.s32 1, %s9
  $region7: #{tpu_custom_call.1} parent=0 // loop_footer_branch
    %8 = sbr.rel target = $region3
  $region8: #{tpu_custom_call.1} parent=0 // loop_exit
    _

</llo_original>
